<compile_context>
chip_gen: v6e
topology: v6e:2x2x1
jax: 0.10.0
libtpu: 0.0.40
codegen_flags: <defaults>
</compile_context>

<pallas_src>
import jax
import jax.numpy as jnp
from jax.experimental import pallas as pl
from jax.experimental.pallas import tpu as pltpu

# ---- model hyperparameters (match DistributionalNetwork.__init__) ----
INPUTS = 32                      # total concatenated input features
N_ACTIONS = 4
N_ATOMS = 8
N_HIDDEN_LAYERS = 2
N_HIDDEN_UNITS = 32
OUTPUTS = N_ACTIONS * N_ATOMS    # 32
N_LAYERS = 2 + N_HIDDEN_LAYERS   # lin, hidden0, hidden1, lout

ROWS_PER_LANE = 4                # batch rows packed per 128-lane row
LANES = ROWS_PER_LANE * INPUTS   # 128
BATCH = 8

# The block-diagonal packing assumes every layer is 32 -> 32.
assert INPUTS == N_HIDDEN_UNITS == OUTPUTS == 32
assert LANES == 128


def _dist_mlp_kernel(x_ref, w_ref, b_ref, g_ref, o_ref):
    """lin -> relu -> h0 -> relu -> h1 -> relu -> lout -> grouped softmax.

    x_ref: (bm, 128)        4 batch rows packed per lane-row
    w_ref: (4, 128, 128)    per-layer block-diagonal weights (4 copies of W)
    b_ref: (4, 1, 128)      per-layer biases tiled 4x along lanes
    g_ref: (128, 128)       block-diagonal 8x8 ones (per-action atom-sum bcast)
    o_ref: (bm, 128)        packed probabilities (unpacked in the wrapper)
    """
    h = x_ref[...]
    # Three ReLU layers (input layer + 2 hidden layers).
    for layer in range(N_LAYERS - 1):
        h = jnp.maximum(
            jnp.dot(h, w_ref[layer], preferred_element_type=jnp.float32)
            + b_ref[layer],
            0.0,
        )
    logits = (
        jnp.dot(h, w_ref[N_LAYERS - 1], preferred_element_type=jnp.float32)
        + b_ref[N_LAYERS - 1]
    )  # (bm, 128)

    # Grouped softmax over each 8-lane atom group, reshape-free.
    # Subtracting the lane-row max (a single constant per row, hence per group)
    # is mathematically equivalent to per-group max subtraction and keeps
    # exp() <= 1 so nothing overflows.
    m = jnp.max(logits, axis=-1, keepdims=True)
    e = jnp.exp(logits - m)
    # One MXU matmul against the block-diagonal ones matrix broadcasts each
    # action's atom-sum across its 8 lanes (no cross-lane segmented reduce).
    denom = jnp.dot(e, g_ref[...], preferred_element_type=jnp.float32)
    # Exact reciprocal keeps the 1e-5 tolerance / sum-to-1 property tight.
    o_ref[...] = (e * pl.reciprocal(denom, approx=False)).astype(o_ref.dtype)


def _block_diag4(w):
    """(32, 32) -> (128, 128) with 4 copies of w on the diagonal."""
    return jnp.kron(jnp.eye(ROWS_PER_LANE, dtype=jnp.float32), w.astype(jnp.float32))


def pack_params(params):
    """Build the (4,128,128) weight, (4,1,128) bias and (128,128) group operands."""
    names = [("w_in", "b_in"), ("w_h0", "b_h0"), ("w_h1", "b_h1"), ("w_out", "b_out")]
    W = jnp.stack([_block_diag4(params[wn]) for wn, _ in names])            # (4,128,128)
    b = jnp.stack(
        [jnp.tile(params[bn].astype(jnp.float32), (1, ROWS_PER_LANE)) for _, bn in names]
    )                                                                       # (4,1,128)
    lane = jnp.arange(LANES)
    G = (lane[:, None] // N_ATOMS == lane[None, :] // N_ATOMS).astype(jnp.float32)
    return W, b, G


def distributional_network_forward(params, *inputs, block_rows=1024):
    """Equivalent of DistributionalNetwork.forward(*inputs).

    Args:
      params: dict with keys w_in, b_in, w_h0, b_h0, w_h1, b_h1, w_out, b_out.
              Weights are (in, out), biases are (1, out).
      *inputs: arrays of shape (B, f_i); concatenated along axis 1 (sum f_i = 32).
      block_rows: packed lane-rows per grid step (= 4 batch rows each).
    Returns:
      (B, N_ACTIONS, N_ATOMS) float32 softmax distributions.
    """
    x = jnp.concatenate(inputs, axis=1).astype(jnp.float32)
    B = x.shape[0]
    assert x.shape[1] == INPUTS, "concatenated feature width must equal INPUTS"

    rows = pl.cdiv(B, ROWS_PER_LANE)
    if rows <= block_rows:
        bm = max(rows, 1)              # single block; block shape == full array dims
        rows_pad = bm
    else:
        bm = block_rows                # >= 2 grid steps for large B (both v7x TCs used)
        rows_pad = pl.cdiv(rows, bm) * bm

    total = rows_pad * ROWS_PER_LANE
    if total != B:
        # Only the ragged tail is padded; zero rows softmax to finite values and
        # are sliced off below.
        x = jnp.pad(x, ((0, total - B), (0, 0)))
    xp = x.reshape(rows_pad, LANES)    # row-major pack: free layout bitcast

    W, b, G = pack_params(params)

    flat = pl.pallas_call(
        _dist_mlp_kernel,
        out_shape=jax.ShapeDtypeStruct((rows_pad, LANES), jnp.float32),
        grid=(rows_pad // bm,),
        in_specs=[
            pl.BlockSpec((bm, LANES), lambda i: (i, 0)),
            # Weights / biases / group matrix: same block every step -> VMEM resident.
            pl.BlockSpec((N_LAYERS, LANES, LANES), lambda i: (0, 0, 0)),
            pl.BlockSpec((N_LAYERS, 1, LANES), lambda i: (0, 0, 0)),
            pl.BlockSpec((LANES, LANES), lambda i: (0, 0)),
        ],
        out_specs=pl.BlockSpec((bm, LANES), lambda i: (i, 0)),
        compiler_params=pltpu.CompilerParams(
            dimension_semantics=("parallel",),
            vmem_limit_bytes=32 * 1024 * 1024,
        ),
    )(xp, W, b, G)

    # Row-major unpack: (rows_pad, 128) -> (total, 4, 8) is a free reshape.
    return flat.reshape(total, N_ACTIONS, N_ATOMS)[:B]


def _init_linear(key, fan_in, fan_out):
    """Deterministic init mimicking nn.Linear (uniform +-1/sqrt(fan_in)); weight is (in, out)."""
    kw, kb = jax.random.split(key)
    bound = 1.0 / jnp.sqrt(jnp.float32(fan_in))
    w = jax.random.uniform(kw, (fan_in, fan_out), jnp.float32, -bound, bound)
    b = jax.random.uniform(kb, (1, fan_out), jnp.float32, -bound, bound)
    return w, b


def make_params(key):
    k0, k1, k2, k3 = jax.random.split(key, 4)
    w_in, b_in = _init_linear(k0, INPUTS, N_HIDDEN_UNITS)
    w_h0, b_h0 = _init_linear(k1, N_HIDDEN_UNITS, N_HIDDEN_UNITS)
    w_h1, b_h1 = _init_linear(k2, N_HIDDEN_UNITS, N_HIDDEN_UNITS)
    w_out, b_out = _init_linear(k3, N_HIDDEN_UNITS, OUTPUTS)
    return dict(w_in=w_in, b_in=b_in, w_h0=w_h0, b_h0=b_h0,
                w_h1=w_h1, b_h1=b_h1, w_out=w_out, b_out=b_out)


def reference_forward(params, *inputs):
    """Pure-JAX reference matching the PyTorch module semantics."""
    x = jnp.concatenate(inputs, axis=1).astype(jnp.float32)
    h = jnp.maximum(x @ params["w_in"] + params["b_in"], 0.0)
    h = jnp.maximum(h @ params["w_h0"] + params["b_h0"], 0.0)
    h = jnp.maximum(h @ params["w_h1"] + params["b_h1"], 0.0)
    logits = h @ params["w_out"] + params["b_out"]
    z = logits.reshape(x.shape[0], N_ACTIONS, N_ATOMS)
    return jax.nn.softmax(z, axis=-1)


if __name__ == "__main__":
    key = jax.random.PRNGKey(0)
    kp, kx1, kx2, ky1, ky2 = jax.random.split(key, 5)
    params = make_params(kp)

    # --- small-batch path (single block): two inputs concatenated along dim 1 ---
    x1 = jax.random.normal(kx1, (BATCH, 20), jnp.float32)
    x2 = jax.random.normal(kx2, (BATCH, 12), jnp.float32)

    out = distributional_network_forward(params, x1, x2)
    out = jax.block_until_ready(out)
    ref = reference_forward(params, x1, x2)
    assert out.shape == (BATCH, N_ACTIONS, N_ATOMS)
    assert jnp.allclose(out, ref, atol=1e-5, rtol=1e-5)
    assert jnp.allclose(jnp.sum(out, axis=-1), 1.0, atol=1e-5)

    # --- large-batch path: B % 4 != 0 (packing pad) + multi-step parallel grid ---
    big_b = 2050                       # rows = 513 > block_rows=256 -> grid of 3 steps
    y1 = jax.random.normal(ky1, (big_b, 20), jnp.float32)
    y2 = jax.random.normal(ky2, (big_b, 12), jnp.float32)

    out_big = distributional_network_forward(params, y1, y2, block_rows=256)
    out_big = jax.block_until_ready(out_big)
    ref_big = reference_forward(params, y1, y2)
    assert out_big.shape == (big_b, N_ACTIONS, N_ATOMS)
    assert jnp.allclose(out_big, ref_big, atol=1e-5, rtol=1e-5)
    assert jnp.allclose(jnp.sum(out_big, axis=-1), 1.0, atol=1e-5)

    print("KERNEL_OK")
</pallas_src>

<mosaic_0001>
module attributes {stable_mosaic.version = 11 : i64} {
  func.func @_dist_mlp_kernel(%arg0: i32, %arg1: memref<2x128xf32, #tpu.memory_space<vmem>>, %arg2: memref<4x128x128xf32, #tpu.memory_space<vmem>>, %arg3: memref<4x1x128xf32, #tpu.memory_space<vmem>>, %arg4: memref<128x128xf32, #tpu.memory_space<vmem>>, %arg5: memref<2x128xf32, #tpu.memory_space<vmem>>) attributes {dimension_semantics = [#tpu.dimension_semantics<parallel>], iteration_bounds = array<i64: 1>, scalar_prefetch = 0 : i64, scratch_operands = 0 : i64, tpu.core_type = #tpu.core_type<tc>, window_params = [{transform_indices = @transform_0, window_bounds = array<i64: 2, 128>}, {pipeline_mode = #tpu.pipeline_mode<synchronous>, transform_indices = @transform_1, window_bounds = array<i64: 4, 128, 128>}, {pipeline_mode = #tpu.pipeline_mode<synchronous>, transform_indices = @transform_2, window_bounds = array<i64: 4, 1, 128>}, {pipeline_mode = #tpu.pipeline_mode<synchronous>, transform_indices = @transform_3, window_bounds = array<i64: 128, 128>}, {transform_indices = @transform_4, window_bounds = array<i64: 2, 128>}]} {
    %c0 = arith.constant 0 : index
    %c0_0 = arith.constant 0 : index
    %0 = vector.load %arg1[%c0, %c0_0] : memref<2x128xf32, #tpu.memory_space<vmem>>, vector<2x128xf32>
    %c0_1 = arith.constant 0 : index
    %c0_2 = arith.constant 0 : index
    %c0_3 = arith.constant 0 : index
    %1 = vector.load %arg2[%c0_1, %c0_2, %c0_3] : memref<4x128x128xf32, #tpu.memory_space<vmem>>, vector<1x128x128xf32>
    %2 = vector.shape_cast %1 : vector<1x128x128xf32> to vector<128x128xf32>
    %cst = arith.constant dense<0.000000e+00> : vector<2x128xf32>
    %3 = tpu.matmul %0, %2, %cst {dimension_numbers = #tpu.dot_dimension_numbers<[1], [0], [0], [1], [0, 0, 1, 1], [], []>} : vector<2x128xf32>, vector<128x128xf32>, vector<2x128xf32> -> vector<2x128xf32>
    %c0_4 = arith.constant 0 : index
    %c0_5 = arith.constant 0 : index
    %c0_6 = arith.constant 0 : index
    %4 = vector.load %arg3[%c0_4, %c0_5, %c0_6] : memref<4x1x128xf32, #tpu.memory_space<vmem>>, vector<1x1x128xf32>
    %5 = vector.shape_cast %4 : vector<1x1x128xf32> to vector<1x128xf32>
    %6 = vector.broadcast %5 : vector<1x128xf32> to vector<2x128xf32>
    %7 = arith.addf %3, %6 : vector<2x128xf32>
    %cst_7 = arith.constant 0.000000e+00 : f32
    %8 = vector.broadcast %cst_7 : f32 to vector<2x128xf32>
    %9 = arith.maximumf %7, %8 : vector<2x128xf32>
    %c1 = arith.constant 1 : index
    %c0_8 = arith.constant 0 : index
    %c0_9 = arith.constant 0 : index
    %10 = vector.load %arg2[%c1, %c0_8, %c0_9] : memref<4x128x128xf32, #tpu.memory_space<vmem>>, vector<1x128x128xf32>
    %11 = vector.shape_cast %10 : vector<1x128x128xf32> to vector<128x128xf32>
    %cst_10 = arith.constant dense<0.000000e+00> : vector<2x128xf32>
    %12 = tpu.matmul %9, %11, %cst_10 {dimension_numbers = #tpu.dot_dimension_numbers<[1], [0], [0], [1], [0, 0, 1, 1], [], []>} : vector<2x128xf32>, vector<128x128xf32>, vector<2x128xf32> -> vector<2x128xf32>
    %c1_11 = arith.constant 1 : index
    %c0_12 = arith.constant 0 : index
    %c0_13 = arith.constant 0 : index
    %13 = vector.load %arg3[%c1_11, %c0_12, %c0_13] : memref<4x1x128xf32, #tpu.memory_space<vmem>>, vector<1x1x128xf32>
    %14 = vector.shape_cast %13 : vector<1x1x128xf32> to vector<1x128xf32>
    %15 = vector.broadcast %14 : vector<1x128xf32> to vector<2x128xf32>
    %16 = arith.addf %12, %15 : vector<2x128xf32>
    %cst_14 = arith.constant 0.000000e+00 : f32
    %17 = vector.broadcast %cst_14 : f32 to vector<2x128xf32>
    %18 = arith.maximumf %16, %17 : vector<2x128xf32>
    %c2 = arith.constant 2 : index
    %c0_15 = arith.constant 0 : index
    %c0_16 = arith.constant 0 : index
    %19 = vector.load %arg2[%c2, %c0_15, %c0_16] : memref<4x128x128xf32, #tpu.memory_space<vmem>>, vector<1x128x128xf32>
    %20 = vector.shape_cast %19 : vector<1x128x128xf32> to vector<128x128xf32>
    %cst_17 = arith.constant dense<0.000000e+00> : vector<2x128xf32>
    %21 = tpu.matmul %18, %20, %cst_17 {dimension_numbers = #tpu.dot_dimension_numbers<[1], [0], [0], [1], [0, 0, 1, 1], [], []>} : vector<2x128xf32>, vector<128x128xf32>, vector<2x128xf32> -> vector<2x128xf32>
    %c2_18 = arith.constant 2 : index
    %c0_19 = arith.constant 0 : index
    %c0_20 = arith.constant 0 : index
    %22 = vector.load %arg3[%c2_18, %c0_19, %c0_20] : memref<4x1x128xf32, #tpu.memory_space<vmem>>, vector<1x1x128xf32>
    %23 = vector.shape_cast %22 : vector<1x1x128xf32> to vector<1x128xf32>
    %24 = vector.broadcast %23 : vector<1x128xf32> to vector<2x128xf32>
    %25 = arith.addf %21, %24 : vector<2x128xf32>
    %cst_21 = arith.constant 0.000000e+00 : f32
    %26 = vector.broadcast %cst_21 : f32 to vector<2x128xf32>
    %27 = arith.maximumf %25, %26 : vector<2x128xf32>
    %c3 = arith.constant 3 : index
    %c0_22 = arith.constant 0 : index
    %c0_23 = arith.constant 0 : index
    %28 = vector.load %arg2[%c3, %c0_22, %c0_23] : memref<4x128x128xf32, #tpu.memory_space<vmem>>, vector<1x128x128xf32>
    %29 = vector.shape_cast %28 : vector<1x128x128xf32> to vector<128x128xf32>
    %cst_24 = arith.constant dense<0.000000e+00> : vector<2x128xf32>
    %30 = tpu.matmul %27, %29, %cst_24 {dimension_numbers = #tpu.dot_dimension_numbers<[1], [0], [0], [1], [0, 0, 1, 1], [], []>} : vector<2x128xf32>, vector<128x128xf32>, vector<2x128xf32> -> vector<2x128xf32>
    %c3_25 = arith.constant 3 : index
    %c0_26 = arith.constant 0 : index
    %c0_27 = arith.constant 0 : index
    %31 = vector.load %arg3[%c3_25, %c0_26, %c0_27] : memref<4x1x128xf32, #tpu.memory_space<vmem>>, vector<1x1x128xf32>
    %32 = vector.shape_cast %31 : vector<1x1x128xf32> to vector<1x128xf32>
    %33 = vector.broadcast %32 : vector<1x128xf32> to vector<2x128xf32>
    %34 = arith.addf %30, %33 : vector<2x128xf32>
    %cst_28 = arith.constant dense<0xFF800000> : vector<2xf32>
    %35 = vector.multi_reduction <maximumf>, %34, %cst_28 [1] : vector<2x128xf32> to vector<2xf32>
    %36 = vector.shape_cast %35 : vector<2xf32> to vector<2x1xf32>
    %37 = vector.broadcast %36 : vector<2x1xf32> to vector<2x128xf32>
    %38 = arith.subf %34, %37 : vector<2x128xf32>
    %39 = math.exp %38 : vector<2x128xf32>
    %c0_29 = arith.constant 0 : index
    %c0_30 = arith.constant 0 : index
    %40 = vector.load %arg4[%c0_29, %c0_30] : memref<128x128xf32, #tpu.memory_space<vmem>>, vector<128x128xf32>
    %cst_31 = arith.constant dense<0.000000e+00> : vector<2x128xf32>
    %41 = tpu.matmul %39, %40, %cst_31 {dimension_numbers = #tpu.dot_dimension_numbers<[1], [0], [0], [1], [0, 0, 1, 1], [], []>} : vector<2x128xf32>, vector<128x128xf32>, vector<2x128xf32> -> vector<2x128xf32>
    %42 = tpu.reciprocal %41 : vector<2x128xf32> -> vector<2x128xf32>
    %43 = arith.mulf %39, %42 : vector<2x128xf32>
    %c0_32 = arith.constant 0 : index
    %c0_33 = arith.constant 0 : index
    %44 = vector.load %arg5[%c0_32, %c0_33] : memref<2x128xf32, #tpu.memory_space<vmem>>, vector<2x128xf32>
    tpu.vector_store %arg5[%c0_32, %c0_33], %43 {strides = array<i32>} : memref<2x128xf32, #tpu.memory_space<vmem>>, vector<2x128xf32>,
    return
  }
  func.func @transform_0(%arg0: i32) -> (i32, i32) {
    %c0_i32 = arith.constant 0 : i32
    %c0_i32_0 = arith.constant 0 : i32
    return %arg0, %c0_i32 : i32, i32
  }
  func.func @transform_1(%arg0: i32) -> (i32, i32, i32) {
    %c0_i32 = arith.constant 0 : i32
    %c0_i32_0 = arith.constant 0 : i32
    %c0_i32_1 = arith.constant 0 : i32
    %c0_i32_2 = arith.constant 0 : i32
    return %c0_i32, %c0_i32_0, %c0_i32_1 : i32, i32, i32
  }
  func.func @transform_2(%arg0: i32) -> (i32, i32, i32) {
    %c0_i32 = arith.constant 0 : i32
    %c0_i32_0 = arith.constant 0 : i32
    %c0_i32_1 = arith.constant 0 : i32
    %c0_i32_2 = arith.constant 0 : i32
    return %c0_i32, %c0_i32_0, %c0_i32_1 : i32, i32, i32
  }
  func.func @transform_3(%arg0: i32) -> (i32, i32) {
    %c0_i32 = arith.constant 0 : i32
    %c0_i32_0 = arith.constant 0 : i32
    %c0_i32_1 = arith.constant 0 : i32
    return %c0_i32, %c0_i32_0 : i32, i32
  }
  func.func @transform_4(%arg0: i32) -> (i32, i32) {
    %c0_i32 = arith.constant 0 : i32
    %c0_i32_0 = arith.constant 0 : i32
    return %arg0, %c0_i32 : i32, i32
  }
}

</mosaic_0001>

<llo_original>
// kernel: tpu_custom_call.1
$region0: #{tpu_custom_call.1}
  #allocation0 [shape = 'u32[]', space=smem, size = 0x4, offset = 0x4, fixed_abs, tag = 'smem constant byte address 0x4 - core index']
  #allocation1 [shape = 'u32[144,128]{1,0:T(1,128)}', space=vmem, size = 0x12000, scoped, tag = 'internal scratch']
  %s0 = inlined_call_operand.hbm [shape: f32[2,128], index: 0, kind: input, shape index: {}]
  %s1 = inlined_call_operand.hbm [shape: f32[4,128,128], index: 1, kind: input, shape index: {}]
  %s2 = inlined_call_operand.hbm [shape: f32[4,1,128], index: 2, kind: input, shape index: {}]
  %s3 = inlined_call_operand.hbm [shape: f32[128,128], index: 3, kind: input, shape index: {}]
  %s4 = inlined_call_operand.hbm [shape: f32[2,128], index: 4, kind: output, shape index: {}]
  %s5 = sld [smem:[#allocation0]]
  $region42: #{tpu_custom_call.1} parent=0
    _
  %s7 = ssub.s32 1, %s5
  %s8 = scalar_select 0, %s7, %s5
  $region1: #{tpu_custom_call.1} parent=0
    #allocation2 [shape = 'u8[1024]{0}', space=vmem, size = 0x400, scoped, tag = 'input window, operand 0, single buffered']
    #allocation3 [shape = 's32[1]{0}', space=sflag, size = 0x4, scoped, tag = 'scoped memory for tpu_custom_call.1']
    #allocation4 [shape = 's32[1]{0}', space=sflag, size = 0x4, scoped, tag = 'scoped memory for tpu_custom_call.1']
    #allocation5 [shape = 'u8[262144]{0}', space=vmem, size = 0x40000, scoped, tag = 'input window, operand 1, single buffered']
    #allocation6 [shape = 's32[1]{0}', space=sflag, size = 0x4, scoped, tag = 'scoped memory for tpu_custom_call.1']
    #allocation7 [shape = 'u8[2048]{0}', space=vmem, size = 0x800, scoped, tag = 'input window, operand 2, single buffered']
    #allocation8 [shape = 'u8[65536]{0}', space=vmem, size = 0x10000, scoped, tag = 'input window, operand 3, single buffered']
    #allocation9 [shape = 's32[1]{0}', space=sflag, size = 0x4, scoped, tag = 'scoped memory for tpu_custom_call.1']
    #allocation10 [shape = 'u8[1024]{0}', space=vmem, size = 0x400, scoped, tag = 'output window, operand 0, single buffered']
    %9 = vsyncpa [#allocation3], 0
    %10 = vsyncpa [#allocation6], 0
    %11 = vsyncpa [#allocation9], 0
    %12 = vsyncpa [#allocation4], 0
    // Predicated region
    $region2: #{tpu_custom_call.1} parent=1 // pred_check
      _
    $region3: #{tpu_custom_call.1} parent=1 // pred_check_branch
      %14 = sbr.rel (0) target = $region5
    $region4: #{tpu_custom_call.1} parent=1 // pred_region
      %s16 = ssub.s32 32, 32
      %17 = vsyncadd [#allocation3], %s16
      %s19 = sshll.u32 [#allocation2], 4
      %s20 = int_to_ptr.vmem [resolvable:$true] %s19
      %22 = dma.hbm_to_vmem [thread:$0]  %s0, 32, %s20, [#allocation3]
    $region5: #{tpu_custom_call.1} parent=1 // pred_fallthru
      _
    // Predicated region
    $region6: #{tpu_custom_call.1} parent=1 // pred_check
      _
    $region7: #{tpu_custom_call.1} parent=1 // pred_check_branch
      %24 = sbr.rel (0) target = $region9
    $region8: #{tpu_custom_call.1} parent=1 // pred_region
      %s26 = ssub.s32 8192, 8192
      %27 = vsyncadd [#allocation6], %s26
      %s28 = sshll.u32 [#allocation5], 4
      %s29 = int_to_ptr.vmem [resolvable:$true] %s28
      %34 = dma.hbm_to_vmem [thread:$0]  %s1, 8192, %s29, [#allocation6], 128, 128, 8
    $region9: #{tpu_custom_call.1} parent=1 // pred_fallthru
      _
    // Predicated region
    $region10: #{tpu_custom_call.1} parent=1 // pred_check
      _
    $region11: #{tpu_custom_call.1} parent=1 // pred_check_branch
      %36 = sbr.rel (0) target = $region13
    $region12: #{tpu_custom_call.1} parent=1 // pred_region
      %s38 = ssub.s32 64, 64
      %39 = vsyncadd [#allocation6], %s38
      %s40 = sshll.u32 [#allocation7], 4
      %s41 = int_to_ptr.vmem [resolvable:$true] %s40
      %46 = dma.hbm_to_vmem [thread:$0]  %s2, 64, %s41, [#allocation6], 16, 16, 1
    $region13: #{tpu_custom_call.1} parent=1 // pred_fallthru
      _
    // Predicated region
    $region14: #{tpu_custom_call.1} parent=1 // pred_check
      _
    $region15: #{tpu_custom_call.1} parent=1 // pred_check_branch
      %48 = sbr.rel (0) target = $region17
    $region16: #{tpu_custom_call.1} parent=1 // pred_region
      %s50 = ssub.s32 2048, 2048
      %51 = vsyncadd [#allocation9], %s50
      %s52 = sshll.u32 [#allocation8], 4
      %s53 = int_to_ptr.vmem [resolvable:$true] %s52
      %58 = dma.hbm_to_vmem [thread:$0]  %s3, 2048, %s53, [#allocation9], 128, 128, 8
    $region17: #{tpu_custom_call.1} parent=1 // pred_fallthru
      _
    // Predicated region
    $region18: #{tpu_custom_call.1} parent=1 // pred_check
      _
    $region19: #{tpu_custom_call.1} parent=1 // pred_check_branch
      %60 = sbr.rel (0) target = $region21
    $region20: #{tpu_custom_call.1} parent=1 // pred_region
      %61 = dma.done [#allocation3], 32
    $region21: #{tpu_custom_call.1} parent=1 // pred_fallthru
      _
    // Predicated region
    $region22: #{tpu_custom_call.1} parent=1 // pred_check
      _
    $region23: #{tpu_custom_call.1} parent=1 // pred_check_branch
      %63 = sbr.rel (0) target = $region25
    $region24: #{tpu_custom_call.1} parent=1 // pred_region
      %64 = dma.done [#allocation6], 8192
    $region25: #{tpu_custom_call.1} parent=1 // pred_fallthru
      _
    // Predicated region
    $region26: #{tpu_custom_call.1} parent=1 // pred_check
      _
    $region27: #{tpu_custom_call.1} parent=1 // pred_check_branch
      %66 = sbr.rel (0) target = $region29
    $region28: #{tpu_custom_call.1} parent=1 // pred_region
      %67 = dma.done [#allocation6], 64
    $region29: #{tpu_custom_call.1} parent=1 // pred_fallthru
      _
    // Predicated region
    $region30: #{tpu_custom_call.1} parent=1 // pred_check
      _
    $region31: #{tpu_custom_call.1} parent=1 // pred_check_branch
      %69 = sbr.rel (0) target = $region33
    $region32: #{tpu_custom_call.1} parent=1 // pred_region
      %70 = dma.done [#allocation9], 2048
    $region33: #{tpu_custom_call.1} parent=1 // pred_fallthru
      _
    %v71 = vld [vmem:[#allocation2] sm:$0x3]
    %v72 = vld [vmem:[#allocation5] sm:$0xff]
    %v73 = vld [vmem:[#allocation5 + $0x8] sm:$0xff]
    %v74 = vld [vmem:[#allocation5 + $0x10] sm:$0xff]
    %v75 = vld [vmem:[#allocation5 + $0x18] sm:$0xff]
    %v76 = vld [vmem:[#allocation5 + $0x20] sm:$0xff]
    %v77 = vld [vmem:[#allocation5 + $0x28] sm:$0xff]
    %v78 = vld [vmem:[#allocation5 + $0x30] sm:$0xff]
    %v79 = vld [vmem:[#allocation5 + $0x38] sm:$0xff]
    %v80 = vld [vmem:[#allocation5 + $0x40] sm:$0xff]
    %v81 = vld [vmem:[#allocation5 + $0x48] sm:$0xff]
    %v82 = vld [vmem:[#allocation5 + $0x50] sm:$0xff]
    %v83 = vld [vmem:[#allocation5 + $0x58] sm:$0xff]
    %v84 = vld [vmem:[#allocation5 + $0x60] sm:$0xff]
    %v85 = vld [vmem:[#allocation5 + $0x68] sm:$0xff]
    %v86 = vld [vmem:[#allocation5 + $0x70] sm:$0xff]
    %v87 = vld [vmem:[#allocation5 + $0x78] sm:$0xff]
    %v88 = vld [vmem:[#allocation7] sm:$0x1]
    %v90 = vlaneseq
    %v91 = vshrl.u32 %v90, 7
    %v92 = vsub.s32 0, %v91
    %v93 = vrot.slane %v88, %v92
    %95 = vmatprep.subr.mxu0 0.0
    %96 = vmatpush1.msra.mxu0 %v87
    %97 = vmatprep.subr.mxu0 0.0
    %98 = vmatpush1.msra.mxu0 %v86
    %99 = vmatprep.subr.mxu0 0.0
    %100 = vmatpush1.msra.mxu0 %v85
    %101 = vmatprep.subr.mxu0 0.0
    %102 = vmatpush1.msra.mxu0 %v84
    %103 = vmatprep.subr.mxu0 0.0
    %104 = vmatpush1.msra.mxu0 %v83
    %105 = vmatprep.subr.mxu0 0.0
    %106 = vmatpush1.msra.mxu0 %v82
    %107 = vmatprep.subr.mxu0 0.0
    %108 = vmatpush1.msra.mxu0 %v81
    %109 = vmatprep.subr.mxu0 0.0
    %110 = vmatpush1.msra.mxu0 %v80
    %111 = vmatprep.subr.mxu0 0.0
    %112 = vmatpush1.msra.mxu0 %v79
    %113 = vmatprep.subr.mxu0 0.0
    %114 = vmatpush1.msra.mxu0 %v78
    %115 = vmatprep.subr.mxu0 0.0
    %116 = vmatpush1.msra.mxu0 %v77
    %117 = vmatprep.subr.mxu0 0.0
    %118 = vmatpush1.msra.mxu0 %v76
    %119 = vmatprep.subr.mxu0 0.0
    %120 = vmatpush1.msra.mxu0 %v75
    %121 = vmatprep.subr.mxu0 0.0
    %122 = vmatpush1.msra.mxu0 %v74
    %123 = vmatprep.subr.mxu0 0.0
    %124 = vmatpush1.msra.mxu0 %v73
    %125 = vmatprep.subr.mxu0 0.0
    %126 = vmatpush1.msra.mxu0 %v72
    %127 = vmatprep.subr.mxu0 0.0
    %128 = vmatpush2.msra.mxu0 0.0
    %129 = vmatprep.subr.mxu0 0.0
    %130 = vmatpush2.msra.mxu0 0.0
    %131 = vmatprep.subr.mxu0 0.0
    %132 = vmatpush2.msra.mxu0 0.0
    %133 = vmatprep.subr.mxu0 0.0
    %134 = vmatpush2.msra.mxu0 0.0
    %135 = vmatprep.subr.mxu0 0.0
    %136 = vmatpush2.msra.mxu0 0.0
    %137 = vmatprep.subr.mxu0 0.0
    %138 = vmatpush2.msra.mxu0 0.0
    %139 = vmatprep.subr.mxu0 0.0
    %140 = vmatpush2.msra.mxu0 0.0
    %141 = vmatprep.subr.mxu0 0.0
    %142 = vmatpush2.msra.mxu0 0.0
    %143 = vmatprep.subr.mxu0 0.0
    %144 = vmatpush2.msra.mxu0 0.0
    %145 = vmatprep.subr.mxu0 0.0
    %146 = vmatpush2.msra.mxu0 0.0
    %147 = vmatprep.subr.mxu0 0.0
    %148 = vmatpush2.msra.mxu0 0.0
    %149 = vmatprep.subr.mxu0 0.0
    %150 = vmatpush2.msra.mxu0 0.0
    %151 = vmatprep.subr.mxu0 0.0
    %152 = vmatpush2.msra.mxu0 0.0
    %153 = vmatprep.subr.mxu0 0.0
    %154 = vmatpush2.msra.mxu0 0.0
    %155 = vmatprep.subr.mxu0 0.0
    %156 = vmatpush2.msra.mxu0 0.0
    %157 = vmatprep.subr.mxu0 0.0
    %158 = vmatpush2.msra.mxu0 0.0
    %159 = vmatprep.mubr.f32.mxu0 0.0
    %160 = vmatmul.mubr.f32.gmra.mxu0 %v71
    %v161 = vpop.f32.mrf.mxu0
    %v162 = vadd.f32 %v93, %v161
    %v163 = vpop.f32.mrf.mxu0
    %164 = vdwg.mxu0
    %v165 = vmax.f32 %v162, 0.0
    %s166 = scalar_lea.vmem [#allocation5], 128
    %v167 = vld [vmem:[%s166] sm:$0xff]
    %v168 = vld [vmem:[%s166 + $0x8] sm:$0xff]
    %v169 = vld [vmem:[%s166 + $0x10] sm:$0xff]
    %v170 = vld [vmem:[%s166 + $0x18] sm:$0xff]
    %v171 = vld [vmem:[%s166 + $0x20] sm:$0xff]
    %v172 = vld [vmem:[%s166 + $0x28] sm:$0xff]
    %v173 = vld [vmem:[%s166 + $0x30] sm:$0xff]
    %v174 = vld [vmem:[%s166 + $0x38] sm:$0xff]
    %v175 = vld [vmem:[%s166 + $0x40] sm:$0xff]
    %v176 = vld [vmem:[%s166 + $0x48] sm:$0xff]
    %v177 = vld [vmem:[%s166 + $0x50] sm:$0xff]
    %v178 = vld [vmem:[%s166 + $0x58] sm:$0xff]
    %v179 = vld [vmem:[%s166 + $0x60] sm:$0xff]
    %v180 = vld [vmem:[%s166 + $0x68] sm:$0xff]
    %v181 = vld [vmem:[%s166 + $0x70] sm:$0xff]
    %v182 = vld [vmem:[%s166 + $0x78] sm:$0xff]
    %s183 = scalar_lea.vmem [#allocation7], 1
    %v184 = vld [vmem:[%s183] sm:$0x1]
    %v186 = vlaneseq
    %v187 = vshrl.u32 %v186, 7
    %v188 = vsub.s32 0, %v187
    %v189 = vrot.slane %v184, %v188
    %191 = vmatprep.subr.mxu0 0.0
    %192 = vmatpush1.msra.mxu0 %v182
    %193 = vmatprep.subr.mxu0 0.0
    %194 = vmatpush1.msra.mxu0 %v181
    %195 = vmatprep.subr.mxu0 0.0
    %196 = vmatpush1.msra.mxu0 %v180
    %197 = vmatprep.subr.mxu0 0.0
    %198 = vmatpush1.msra.mxu0 %v179
    %199 = vmatprep.subr.mxu0 0.0
    %200 = vmatpush1.msra.mxu0 %v178
    %201 = vmatprep.subr.mxu0 0.0
    %202 = vmatpush1.msra.mxu0 %v177
    %203 = vmatprep.subr.mxu0 0.0
    %204 = vmatpush1.msra.mxu0 %v176
    %205 = vmatprep.subr.mxu0 0.0
    %206 = vmatpush1.msra.mxu0 %v175
    %207 = vmatprep.subr.mxu0 0.0
    %208 = vmatpush1.msra.mxu0 %v174
    %209 = vmatprep.subr.mxu0 0.0
    %210 = vmatpush1.msra.mxu0 %v173
    %211 = vmatprep.subr.mxu0 0.0
    %212 = vmatpush1.msra.mxu0 %v172
    %213 = vmatprep.subr.mxu0 0.0
    %214 = vmatpush1.msra.mxu0 %v171
    %215 = vmatprep.subr.mxu0 0.0
    %216 = vmatpush1.msra.mxu0 %v170
    %217 = vmatprep.subr.mxu0 0.0
    %218 = vmatpush1.msra.mxu0 %v169
    %219 = vmatprep.subr.mxu0 0.0
    %220 = vmatpush1.msra.mxu0 %v168
    %221 = vmatprep.subr.mxu0 0.0
    %222 = vmatpush1.msra.mxu0 %v167
    %223 = vmatprep.subr.mxu0 0.0
    %224 = vmatpush2.msra.mxu0 0.0
    %225 = vmatprep.subr.mxu0 0.0
    %226 = vmatpush2.msra.mxu0 0.0
    %227 = vmatprep.subr.mxu0 0.0
    %228 = vmatpush2.msra.mxu0 0.0
    %229 = vmatprep.subr.mxu0 0.0
    %230 = vmatpush2.msra.mxu0 0.0
    %231 = vmatprep.subr.mxu0 0.0
    %232 = vmatpush2.msra.mxu0 0.0
    %233 = vmatprep.subr.mxu0 0.0
    %234 = vmatpush2.msra.mxu0 0.0
    %235 = vmatprep.subr.mxu0 0.0
    %236 = vmatpush2.msra.mxu0 0.0
    %237 = vmatprep.subr.mxu0 0.0
    %238 = vmatpush2.msra.mxu0 0.0
    %239 = vmatprep.subr.mxu0 0.0
    %240 = vmatpush2.msra.mxu0 0.0
    %241 = vmatprep.subr.mxu0 0.0
    %242 = vmatpush2.msra.mxu0 0.0
    %243 = vmatprep.subr.mxu0 0.0
    %244 = vmatpush2.msra.mxu0 0.0
    %245 = vmatprep.subr.mxu0 0.0
    %246 = vmatpush2.msra.mxu0 0.0
    %247 = vmatprep.subr.mxu0 0.0
    %248 = vmatpush2.msra.mxu0 0.0
    %249 = vmatprep.subr.mxu0 0.0
    %250 = vmatpush2.msra.mxu0 0.0
    %251 = vmatprep.subr.mxu0 0.0
    %252 = vmatpush2.msra.mxu0 0.0
    %253 = vmatprep.subr.mxu0 0.0
    %254 = vmatpush2.msra.mxu0 0.0
    %255 = vmatprep.mubr.f32.mxu0 0.0
    %256 = vmatmul.mubr.f32.gmra.mxu0 %v165
    %v257 = vpop.f32.mrf.mxu0
    %v258 = vadd.f32 %v189, %v257
    %v259 = vpop.f32.mrf.mxu0
    %260 = vdwg.mxu0
    %v261 = vmax.f32 %v258, 0.0
    %s262 = scalar_lea.vmem [#allocation5], 256
    %v263 = vld [vmem:[%s262] sm:$0xff]
    %v264 = vld [vmem:[%s262 + $0x8] sm:$0xff]
    %v265 = vld [vmem:[%s262 + $0x10] sm:$0xff]
    %v266 = vld [vmem:[%s262 + $0x18] sm:$0xff]
    %v267 = vld [vmem:[%s262 + $0x20] sm:$0xff]
    %v268 = vld [vmem:[%s262 + $0x28] sm:$0xff]
    %v269 = vld [vmem:[%s262 + $0x30] sm:$0xff]
    %v270 = vld [vmem:[%s262 + $0x38] sm:$0xff]
    %v271 = vld [vmem:[%s262 + $0x40] sm:$0xff]
    %v272 = vld [vmem:[%s262 + $0x48] sm:$0xff]
    %v273 = vld [vmem:[%s262 + $0x50] sm:$0xff]
    %v274 = vld [vmem:[%s262 + $0x58] sm:$0xff]
    %v275 = vld [vmem:[%s262 + $0x60] sm:$0xff]
    %v276 = vld [vmem:[%s262 + $0x68] sm:$0xff]
    %v277 = vld [vmem:[%s262 + $0x70] sm:$0xff]
    %v278 = vld [vmem:[%s262 + $0x78] sm:$0xff]
    %s279 = scalar_lea.vmem [#allocation7], 2
    %v280 = vld [vmem:[%s279] sm:$0x1]
    %v282 = vlaneseq
    %v283 = vshrl.u32 %v282, 7
    %v284 = vsub.s32 0, %v283
    %v285 = vrot.slane %v280, %v284
    %287 = vmatprep.subr.mxu0 0.0
    %288 = vmatpush1.msra.mxu0 %v278
    %289 = vmatprep.subr.mxu0 0.0
    %290 = vmatpush1.msra.mxu0 %v277
    %291 = vmatprep.subr.mxu0 0.0
    %292 = vmatpush1.msra.mxu0 %v276
    %293 = vmatprep.subr.mxu0 0.0
    %294 = vmatpush1.msra.mxu0 %v275
    %295 = vmatprep.subr.mxu0 0.0
    %296 = vmatpush1.msra.mxu0 %v274
    %297 = vmatprep.subr.mxu0 0.0
    %298 = vmatpush1.msra.mxu0 %v273
    %299 = vmatprep.subr.mxu0 0.0
    %300 = vmatpush1.msra.mxu0 %v272
    %301 = vmatprep.subr.mxu0 0.0
    %302 = vmatpush1.msra.mxu0 %v271
    %303 = vmatprep.subr.mxu0 0.0
    %304 = vmatpush1.msra.mxu0 %v270
    %305 = vmatprep.subr.mxu0 0.0
    %306 = vmatpush1.msra.mxu0 %v269
    %307 = vmatprep.subr.mxu0 0.0
    %308 = vmatpush1.msra.mxu0 %v268
    %309 = vmatprep.subr.mxu0 0.0
    %310 = vmatpush1.msra.mxu0 %v267
    %311 = vmatprep.subr.mxu0 0.0
    %312 = vmatpush1.msra.mxu0 %v266
    %313 = vmatprep.subr.mxu0 0.0
    %314 = vmatpush1.msra.mxu0 %v265
    %315 = vmatprep.subr.mxu0 0.0
    %316 = vmatpush1.msra.mxu0 %v264
    %317 = vmatprep.subr.mxu0 0.0
    %318 = vmatpush1.msra.mxu0 %v263
    %319 = vmatprep.subr.mxu0 0.0
    %320 = vmatpush2.msra.mxu0 0.0
    %321 = vmatprep.subr.mxu0 0.0
    %322 = vmatpush2.msra.mxu0 0.0
    %323 = vmatprep.subr.mxu0 0.0
    %324 = vmatpush2.msra.mxu0 0.0
    %325 = vmatprep.subr.mxu0 0.0
    %326 = vmatpush2.msra.mxu0 0.0
    %327 = vmatprep.subr.mxu0 0.0
    %328 = vmatpush2.msra.mxu0 0.0
    %329 = vmatprep.subr.mxu0 0.0
    %330 = vmatpush2.msra.mxu0 0.0
    %331 = vmatprep.subr.mxu0 0.0
    %332 = vmatpush2.msra.mxu0 0.0
    %333 = vmatprep.subr.mxu0 0.0
    %334 = vmatpush2.msra.mxu0 0.0
    %335 = vmatprep.subr.mxu0 0.0
    %336 = vmatpush2.msra.mxu0 0.0
    %337 = vmatprep.subr.mxu0 0.0
    %338 = vmatpush2.msra.mxu0 0.0
    %339 = vmatprep.subr.mxu0 0.0
    %340 = vmatpush2.msra.mxu0 0.0
    %341 = vmatprep.subr.mxu0 0.0
    %342 = vmatpush2.msra.mxu0 0.0
    %343 = vmatprep.subr.mxu0 0.0
    %344 = vmatpush2.msra.mxu0 0.0
    %345 = vmatprep.subr.mxu0 0.0
    %346 = vmatpush2.msra.mxu0 0.0
    %347 = vmatprep.subr.mxu0 0.0
    %348 = vmatpush2.msra.mxu0 0.0
    %349 = vmatprep.subr.mxu0 0.0
    %350 = vmatpush2.msra.mxu0 0.0
    %351 = vmatprep.mubr.f32.mxu0 0.0
    %352 = vmatmul.mubr.f32.gmra.mxu0 %v261
    %v353 = vpop.f32.mrf.mxu0
    %v354 = vadd.f32 %v285, %v353
    %v355 = vpop.f32.mrf.mxu0
    %356 = vdwg.mxu0
    %v357 = vmax.f32 %v354, 0.0
    %s358 = scalar_lea.vmem [#allocation5], 384
    %v359 = vld [vmem:[%s358] sm:$0xff]
    %v360 = vld [vmem:[%s358 + $0x8] sm:$0xff]
    %v361 = vld [vmem:[%s358 + $0x10] sm:$0xff]
    %v362 = vld [vmem:[%s358 + $0x18] sm:$0xff]
    %v363 = vld [vmem:[%s358 + $0x20] sm:$0xff]
    %v364 = vld [vmem:[%s358 + $0x28] sm:$0xff]
    %v365 = vld [vmem:[%s358 + $0x30] sm:$0xff]
    %v366 = vld [vmem:[%s358 + $0x38] sm:$0xff]
    %v367 = vld [vmem:[%s358 + $0x40] sm:$0xff]
    %v368 = vld [vmem:[%s358 + $0x48] sm:$0xff]
    %v369 = vld [vmem:[%s358 + $0x50] sm:$0xff]
    %v370 = vld [vmem:[%s358 + $0x58] sm:$0xff]
    %v371 = vld [vmem:[%s358 + $0x60] sm:$0xff]
    %v372 = vld [vmem:[%s358 + $0x68] sm:$0xff]
    %v373 = vld [vmem:[%s358 + $0x70] sm:$0xff]
    %v374 = vld [vmem:[%s358 + $0x78] sm:$0xff]
    %s375 = scalar_lea.vmem [#allocation7], 3
    %v376 = vld [vmem:[%s375] sm:$0x1]
    %v378 = vlaneseq
    %v379 = vshrl.u32 %v378, 7
    %v380 = vsub.s32 0, %v379
    %v381 = vrot.slane %v376, %v380
    %383 = vmatprep.subr.mxu0 0.0
    %384 = vmatpush1.msra.mxu0 %v374
    %385 = vmatprep.subr.mxu0 0.0
    %386 = vmatpush1.msra.mxu0 %v373
    %387 = vmatprep.subr.mxu0 0.0
    %388 = vmatpush1.msra.mxu0 %v372
    %389 = vmatprep.subr.mxu0 0.0
    %390 = vmatpush1.msra.mxu0 %v371
    %391 = vmatprep.subr.mxu0 0.0
    %392 = vmatpush1.msra.mxu0 %v370
    %393 = vmatprep.subr.mxu0 0.0
    %394 = vmatpush1.msra.mxu0 %v369
    %395 = vmatprep.subr.mxu0 0.0
    %396 = vmatpush1.msra.mxu0 %v368
    %397 = vmatprep.subr.mxu0 0.0
    %398 = vmatpush1.msra.mxu0 %v367
    %399 = vmatprep.subr.mxu0 0.0
    %400 = vmatpush1.msra.mxu0 %v366
    %401 = vmatprep.subr.mxu0 0.0
    %402 = vmatpush1.msra.mxu0 %v365
    %403 = vmatprep.subr.mxu0 0.0
    %404 = vmatpush1.msra.mxu0 %v364
    %405 = vmatprep.subr.mxu0 0.0
    %406 = vmatpush1.msra.mxu0 %v363
    %407 = vmatprep.subr.mxu0 0.0
    %408 = vmatpush1.msra.mxu0 %v362
    %409 = vmatprep.subr.mxu0 0.0
    %410 = vmatpush1.msra.mxu0 %v361
    %411 = vmatprep.subr.mxu0 0.0
    %412 = vmatpush1.msra.mxu0 %v360
    %413 = vmatprep.subr.mxu0 0.0
    %414 = vmatpush1.msra.mxu0 %v359
    %415 = vmatprep.subr.mxu0 0.0
    %416 = vmatpush2.msra.mxu0 0.0
    %417 = vmatprep.subr.mxu0 0.0
    %418 = vmatpush2.msra.mxu0 0.0
    %419 = vmatprep.subr.mxu0 0.0
    %420 = vmatpush2.msra.mxu0 0.0
    %421 = vmatprep.subr.mxu0 0.0
    %422 = vmatpush2.msra.mxu0 0.0
    %423 = vmatprep.subr.mxu0 0.0
    %424 = vmatpush2.msra.mxu0 0.0
    %425 = vmatprep.subr.mxu0 0.0
    %426 = vmatpush2.msra.mxu0 0.0
    %427 = vmatprep.subr.mxu0 0.0
    %428 = vmatpush2.msra.mxu0 0.0
    %429 = vmatprep.subr.mxu0 0.0
    %430 = vmatpush2.msra.mxu0 0.0
    %431 = vmatprep.subr.mxu0 0.0
    %432 = vmatpush2.msra.mxu0 0.0
    %433 = vmatprep.subr.mxu0 0.0
    %434 = vmatpush2.msra.mxu0 0.0
    %435 = vmatprep.subr.mxu0 0.0
    %436 = vmatpush2.msra.mxu0 0.0
    %437 = vmatprep.subr.mxu0 0.0
    %438 = vmatpush2.msra.mxu0 0.0
    %439 = vmatprep.subr.mxu0 0.0
    %440 = vmatpush2.msra.mxu0 0.0
    %441 = vmatprep.subr.mxu0 0.0
    %442 = vmatpush2.msra.mxu0 0.0
    %443 = vmatprep.subr.mxu0 0.0
    %444 = vmatpush2.msra.mxu0 0.0
    %445 = vmatprep.subr.mxu0 0.0
    %446 = vmatpush2.msra.mxu0 0.0
    %447 = vmatprep.mubr.f32.mxu0 0.0
    %448 = vmatmul.mubr.f32.gmra.mxu0 %v357
    %v449 = vpop.f32.mrf.mxu0
    %v450 = vadd.f32 %v381, %v449
    %v451 = vpop.f32.mrf.mxu0
    %452 = vdwg.mxu0
    %vm453 = vcmask 1041408
    %v454 = vsel %vm453, %v450, -inf
    %455 = vmax.xlane.f32.xlu0 %v454
    %v456 = vpop.xlane.xlu0 %455
    %v457 = vsub.f32 %v450, %v456
    %v458 = vmul.f32 %v457, 1.442695
    %v459 = vpow.pop %v458
    %v460 = vld [vmem:[#allocation8] sm:$0xff]
    %v461 = vld [vmem:[#allocation8 + $0x8] sm:$0xff]
    %v462 = vld [vmem:[#allocation8 + $0x10] sm:$0xff]
    %v463 = vld [vmem:[#allocation8 + $0x18] sm:$0xff]
    %v464 = vld [vmem:[#allocation8 + $0x20] sm:$0xff]
    %v465 = vld [vmem:[#allocation8 + $0x28] sm:$0xff]
    %v466 = vld [vmem:[#allocation8 + $0x30] sm:$0xff]
    %v467 = vld [vmem:[#allocation8 + $0x38] sm:$0xff]
    %v468 = vld [vmem:[#allocation8 + $0x40] sm:$0xff]
    %v469 = vld [vmem:[#allocation8 + $0x48] sm:$0xff]
    %v470 = vld [vmem:[#allocation8 + $0x50] sm:$0xff]
    %v471 = vld [vmem:[#allocation8 + $0x58] sm:$0xff]
    %v472 = vld [vmem:[#allocation8 + $0x60] sm:$0xff]
    %v473 = vld [vmem:[#allocation8 + $0x68] sm:$0xff]
    %v474 = vld [vmem:[#allocation8 + $0x70] sm:$0xff]
    %v475 = vld [vmem:[#allocation8 + $0x78] sm:$0xff]
    %476 = vmatprep.subr.mxu0 0.0
    %477 = vmatpush1.msra.mxu0 %v475
    %478 = vmatprep.subr.mxu0 0.0
    %479 = vmatpush1.msra.mxu0 %v474
    %480 = vmatprep.subr.mxu0 0.0
    %481 = vmatpush1.msra.mxu0 %v473
    %482 = vmatprep.subr.mxu0 0.0
    %483 = vmatpush1.msra.mxu0 %v472
    %484 = vmatprep.subr.mxu0 0.0
    %485 = vmatpush1.msra.mxu0 %v471
    %486 = vmatprep.subr.mxu0 0.0
    %487 = vmatpush1.msra.mxu0 %v470
    %488 = vmatprep.subr.mxu0 0.0
    %489 = vmatpush1.msra.mxu0 %v469
    %490 = vmatprep.subr.mxu0 0.0
    %491 = vmatpush1.msra.mxu0 %v468
    %492 = vmatprep.subr.mxu0 0.0
    %493 = vmatpush1.msra.mxu0 %v467
    %494 = vmatprep.subr.mxu0 0.0
    %495 = vmatpush1.msra.mxu0 %v466
    %496 = vmatprep.subr.mxu0 0.0
    %497 = vmatpush1.msra.mxu0 %v465
    %498 = vmatprep.subr.mxu0 0.0
    %499 = vmatpush1.msra.mxu0 %v464
    %500 = vmatprep.subr.mxu0 0.0
    %501 = vmatpush1.msra.mxu0 %v463
    %502 = vmatprep.subr.mxu0 0.0
    %503 = vmatpush1.msra.mxu0 %v462
    %504 = vmatprep.subr.mxu0 0.0
    %505 = vmatpush1.msra.mxu0 %v461
    %506 = vmatprep.subr.mxu0 0.0
    %507 = vmatpush1.msra.mxu0 %v460
    %508 = vmatprep.subr.mxu0 0.0
    %509 = vmatpush2.msra.mxu0 0.0
    %510 = vmatprep.subr.mxu0 0.0
    %511 = vmatpush2.msra.mxu0 0.0
    %512 = vmatprep.subr.mxu0 0.0
    %513 = vmatpush2.msra.mxu0 0.0
    %514 = vmatprep.subr.mxu0 0.0
    %515 = vmatpush2.msra.mxu0 0.0
    %516 = vmatprep.subr.mxu0 0.0
    %517 = vmatpush2.msra.mxu0 0.0
    %518 = vmatprep.subr.mxu0 0.0
    %519 = vmatpush2.msra.mxu0 0.0
    %520 = vmatprep.subr.mxu0 0.0
    %521 = vmatpush2.msra.mxu0 0.0
    %522 = vmatprep.subr.mxu0 0.0
    %523 = vmatpush2.msra.mxu0 0.0
    %524 = vmatprep.subr.mxu0 0.0
    %525 = vmatpush2.msra.mxu0 0.0
    %526 = vmatprep.subr.mxu0 0.0
    %527 = vmatpush2.msra.mxu0 0.0
    %528 = vmatprep.subr.mxu0 0.0
    %529 = vmatpush2.msra.mxu0 0.0
    %530 = vmatprep.subr.mxu0 0.0
    %531 = vmatpush2.msra.mxu0 0.0
    %532 = vmatprep.subr.mxu0 0.0
    %533 = vmatpush2.msra.mxu0 0.0
    %534 = vmatprep.subr.mxu0 0.0
    %535 = vmatpush2.msra.mxu0 0.0
    %536 = vmatprep.subr.mxu0 0.0
    %537 = vmatpush2.msra.mxu0 0.0
    %538 = vmatprep.subr.mxu0 0.0
    %539 = vmatpush2.msra.mxu0 0.0
    %540 = vmatprep.mubr.f32.mxu0 0.0
    %541 = vmatmul.mubr.f32.gmra.mxu0 %v459
    %v542 = vpop.f32.mrf.mxu0
    %v543 = vadd.f32 0.0, %v542
    %v544 = vpop.f32.mrf.mxu0
    %545 = vdwg.mxu0
    %v546 = vrcp.pop %v543
    %v547 = vmul.f32 %v459, %v546
    %548 = vst [vmem:[#allocation10] sm:$0x3] %v547
    // Predicated region
    $region34: #{tpu_custom_call.1} parent=1 // pred_check
      _
    $region35: #{tpu_custom_call.1} parent=1 // pred_check_branch
      %550 = sbr.rel (0) target = $region37
    $region36: #{tpu_custom_call.1} parent=1 // pred_region
      %s552 = ssub.s32 32, 32
      %553 = vsyncadd [#allocation4], %s552
      %s555 = sshll.u32 [#allocation10], 4
      %s556 = int_to_ptr.vmem [resolvable:$true] %s555
      %558 = dma.vmem_to_hbm [thread:$0]  %s556, 32, %s4, [#allocation4]
    $region37: #{tpu_custom_call.1} parent=1 // pred_fallthru
      _
    // Predicated region
    $region38: #{tpu_custom_call.1} parent=1 // pred_check
      _
    $region39: #{tpu_custom_call.1} parent=1 // pred_check_branch
      %560 = sbr.rel (0) target = $region41
    $region40: #{tpu_custom_call.1} parent=1 // pred_region
      %561 = dma.done [#allocation4], 32
    $region41: #{tpu_custom_call.1} parent=1 // pred_fallthru
      _
    %562 = vsyncpa [#allocation3], 1
    %563 = vsyncpa [#allocation6], 1
    %564 = vsyncpa [#allocation9], 1
    %565 = vsyncpa [#allocation4], 1

</llo_original>
